<compile_context>
chip_gen: v5e
topology: v5e:2x2
jax: 0.10.0
libtpu: 0.0.40
codegen_flags: <defaults>
</compile_context>

<pallas_src>
import functools
from typing import NamedTuple

import jax
import jax.numpy as jnp
import numpy as np
from jax.experimental import pallas as pl
from jax.experimental.pallas import tpu as pltpu

_SUBLANE = 8   # f32 sublane group
_LANE = 128    # lane width


def _round_up(x, m):
    return ((x + m - 1) // m) * m


class Layout(NamedTuple):
    """Static packing layout of the parameter slab (hashable -> jit-static)."""
    TF: int      # T * F  (flattened input width)
    TD: int      # T * D  (encoder output / MLP input width)
    H1: int
    H2: int
    OUTP: int    # outdim padded to a full lane group
    outdim: int
    r_be: int    # slab row offsets (all sublane aligned)
    r_b1: int
    r_b2: int
    r_b3: int
    r_w1: int
    r_w2: int
    r_w3: int


def _head_kernel(x_ref, p_ref, o_ref, *, layout):
    """Fused block-diagonal encoder GEMM + 3-layer MLP head.

    x_ref : [Bp, TF]    row-major flattened photometric input
    p_ref : [rows, LW]  packed parameter slab (Wbd, biases, W1, W2, W3p)
    o_ref : [Bp, OUTP]  lane-padded output slab
    """
    L = layout
    x = x_ref[...]

    wbd = p_ref[0:L.TF, 0:L.TD]                       # [TF, TD] block-diag encoder
    be = p_ref[L.r_be:L.r_be + 1, 0:L.TD]             # [1, TD]  tiled encoder bias
    b1 = p_ref[L.r_b1:L.r_b1 + 1, 0:L.H1]
    b2 = p_ref[L.r_b2:L.r_b2 + 1, 0:L.H2]
    b3 = p_ref[L.r_b3:L.r_b3 + 1, 0:L.OUTP]
    w1 = p_ref[L.r_w1:L.r_w1 + L.TD, 0:L.H1]          # [TD, H1]
    w2 = p_ref[L.r_w2:L.r_w2 + L.H1, 0:L.H2]          # [H1, H2]
    w3 = p_ref[L.r_w3:L.r_w3 + L.H2, 0:L.OUTP]        # [H2, OUTP] lane-padded

    # Encoder (all T time steps in one GEMM, MXU-internal K accumulation).
    h = jnp.tanh(jnp.dot(x, wbd, preferred_element_type=jnp.float32) + be)
    # Regression head.
    z = jnp.maximum(jnp.dot(h, w1, preferred_element_type=jnp.float32) + b1, 0.0)
    z = jnp.maximum(jnp.dot(z, w2, preferred_element_type=jnp.float32) + b2, 0.0)
    o_ref[...] = (
        jnp.dot(z, w3, preferred_element_type=jnp.float32) + b3
    ).astype(o_ref.dtype)


def prepare_params(params):
    """One-time parameter packing (hoisted out of the per-call path).

    Returns (slab, layout): a single contiguous f32 parameter slab plus the
    static row/width layout describing where each tensor lives.
    """
    We = jnp.asarray(params["We"], jnp.float32)        # [F, D]
    F, D = We.shape
    W1 = jnp.asarray(params["W1"], jnp.float32)        # [T*D, H1]
    TD, H1 = W1.shape
    T = TD // D
    TF = T * F
    W2 = jnp.asarray(params["W2"], jnp.float32)        # [H1, H2]
    H2 = W2.shape[1]
    W3 = jnp.asarray(params["W3"], jnp.float32)        # [H2, outdim]
    outdim = W3.shape[1]
    OUTP = _round_up(outdim, _LANE)

    # Slab lane width: widest tensor, lane-group aligned.
    LW = max(_round_up(TD, _LANE), _round_up(H1, _LANE),
             _round_up(H2, _LANE), OUTP)

    # Sublane-aligned row offsets for every block.
    r_wbd = 0
    r_be = _round_up(TF, _SUBLANE)
    r_b1 = r_be + _SUBLANE
    r_b2 = r_b1 + _SUBLANE
    r_b3 = r_b2 + _SUBLANE
    r_w1 = r_b3 + _SUBLANE
    r_w2 = r_w1 + _round_up(TD, _SUBLANE)
    r_w3 = r_w2 + _round_up(H1, _SUBLANE)
    rows = r_w3 + _round_up(H2, _SUBLANE)

    # Block-diagonal encoder weight: blockdiag(We repeated T times).
    Wbd = jnp.kron(jnp.eye(T, dtype=jnp.float32), We)                # [TF, TD]
    be_tiled = jnp.tile(jnp.asarray(params["be"], jnp.float32).reshape(D), T)

    slab = jnp.zeros((rows, LW), jnp.float32)
    slab = slab.at[r_wbd:r_wbd + TF, 0:TD].set(Wbd)
    slab = slab.at[r_be, 0:TD].set(be_tiled)
    slab = slab.at[r_b1, 0:H1].set(jnp.asarray(params["b1"], jnp.float32))
    slab = slab.at[r_b2, 0:H2].set(jnp.asarray(params["b2"], jnp.float32))
    slab = slab.at[r_b3, 0:outdim].set(jnp.asarray(params["b3"], jnp.float32))
    slab = slab.at[r_w1:r_w1 + TD, 0:H1].set(W1)
    slab = slab.at[r_w2:r_w2 + H1, 0:H2].set(W2)
    slab = slab.at[r_w3:r_w3 + H2, 0:outdim].set(W3)

    layout = Layout(TF=TF, TD=TD, H1=H1, H2=H2, OUTP=OUTP, outdim=outdim,
                    r_be=r_be, r_b1=r_b1, r_b2=r_b2, r_b3=r_b3,
                    r_w1=r_w1, r_w2=r_w2, r_w3=r_w3)
    return slab, layout


@functools.partial(jax.jit, static_argnames=("layout",))
def contras_photo_regression_head(x, slab, layout):
    """x: [B, T, F] float32 -> [B, outdim]."""
    B = x.shape[0]
    L = layout

    # Per-call plumbing only: row-major flatten (free) + batch pad to a full
    # sublane group; output sliced back below.
    Bp = max(_SUBLANE, _round_up(B, _SUBLANE))
    x2d = x.reshape(B, L.TF)
    if Bp != B:
        x2d = jnp.pad(x2d, ((0, Bp - B), (0, 0)))

    flops = 2 * Bp * (L.TF * L.TD + L.TD * L.H1 + L.H1 * L.H2 + L.H2 * L.OUTP)
    bytes_accessed = 4 * (x2d.size + slab.size + Bp * L.OUTP)
    cost = pl.CostEstimate(flops=flops, transcendentals=Bp * L.TD,
                           bytes_accessed=bytes_accessed)

    vmem = pl.BlockSpec(memory_space=pltpu.MemorySpace.VMEM)
    out = pl.pallas_call(
        functools.partial(_head_kernel, layout=layout),
        out_shape=jax.ShapeDtypeStruct((Bp, L.OUTP), x.dtype),
        in_specs=[vmem, vmem],
        out_specs=vmem,
        cost_estimate=cost,
    )(x2d, slab)
    return out[:B, :L.outdim]


def _reference(x, params):
    """Plain-JAX reference of the same forward pass."""
    B = x.shape[0]
    h = jnp.tanh(jnp.einsum("btf,fd->btd", x, params["We"]) + params["be"])
    hf = h.reshape(B, -1)
    z = jax.nn.relu(hf @ params["W1"] + params["b1"])
    z = jax.nn.relu(z @ params["W2"] + params["b2"])
    return z @ params["W3"] + params["b3"]


def _init_params(key, T, F, D, hidden, outdim):
    ks = jax.random.split(key, 8)
    flat = T * D
    H1, H2 = hidden
    scale = 0.1
    return {
        "We": scale * jax.random.normal(ks[0], (F, D), jnp.float32),
        "be": scale * jax.random.normal(ks[1], (D,), jnp.float32),
        "W1": scale * jax.random.normal(ks[2], (flat, H1), jnp.float32),
        "b1": scale * jax.random.normal(ks[3], (H1,), jnp.float32),
        "W2": scale * jax.random.normal(ks[4], (H1, H2), jnp.float32),
        "b2": scale * jax.random.normal(ks[5], (H2,), jnp.float32),
        "W3": scale * jax.random.normal(ks[6], (H2, outdim), jnp.float32),
        "b3": scale * jax.random.normal(ks[7], (outdim,), jnp.float32),
    }


if __name__ == "__main__":
    # Small shapes consistent with the module:
    #   batch B=2, latent_len T=8, per-obs features F=4, latent_dim D=32,
    #   MLPlatent=[64, 64], outdim=3.
    B, T, F, D = 2, 8, 4, 32
    hidden = (64, 64)
    outdim = 3

    key = jax.random.PRNGKey(0)
    kx, kp = jax.random.split(key)
    x = jax.random.normal(kx, (B, T, F), jnp.float32)
    params = _init_params(kp, T, F, D, hidden, outdim)

    # One-time parameter packing (not in the per-call path).
    slab, layout = prepare_params(params)

    out = contras_photo_regression_head(x, slab, layout=layout)
    out = jax.block_until_ready(out)

    ref = jax.block_until_ready(_reference(x, params))
    if not np.allclose(np.asarray(out), np.asarray(ref), rtol=1e-4, atol=1e-5):
        raise AssertionError("Pallas kernel does not match JAX reference")

    print("KERNEL_OK")
</pallas_src>

<mosaic_0001>
module attributes {stable_mosaic.version = 11 : i64} {
  func.func @_head_kernel(%arg0: memref<8x32xf32, #tpu.memory_space<vmem>>, %arg1: memref<448x256xf32, #tpu.memory_space<vmem>>, %arg2: memref<8x128xf32, #tpu.memory_space<vmem>>) attributes {dimension_semantics = [], scalar_prefetch = 0 : i64, scratch_operands = 0 : i64, tpu.core_type = #tpu.core_type<tc>} {
    %c0 = arith.constant 0 : index
    %c0_0 = arith.constant 0 : index
    %0 = vector.load %arg0[%c0, %c0_0] : memref<8x32xf32, #tpu.memory_space<vmem>>, vector<8x32xf32>
    %c0_1 = arith.constant 0 : index
    %c0_2 = arith.constant 0 : index
    %1 = vector.load %arg1[%c0_1, %c0_2] : memref<448x256xf32, #tpu.memory_space<vmem>>, vector<32x256xf32>
    %c32 = arith.constant 32 : index
    %c0_3 = arith.constant 0 : index
    %2 = vector.load %arg1[%c32, %c0_3] : memref<448x256xf32, #tpu.memory_space<vmem>>, vector<1x256xf32>
    %c40 = arith.constant 40 : index
    %c0_4 = arith.constant 0 : index
    %3 = vector.load %arg1[%c40, %c0_4] : memref<448x256xf32, #tpu.memory_space<vmem>>, vector<1x64xf32>
    %c48 = arith.constant 48 : index
    %c0_5 = arith.constant 0 : index
    %4 = vector.load %arg1[%c48, %c0_5] : memref<448x256xf32, #tpu.memory_space<vmem>>, vector<1x64xf32>
    %c56 = arith.constant 56 : index
    %c0_6 = arith.constant 0 : index
    %5 = vector.load %arg1[%c56, %c0_6] : memref<448x256xf32, #tpu.memory_space<vmem>>, vector<1x128xf32>
    %c64 = arith.constant 64 : index
    %c0_7 = arith.constant 0 : index
    %6 = vector.load %arg1[%c64, %c0_7] : memref<448x256xf32, #tpu.memory_space<vmem>>, vector<256x64xf32>
    %c320 = arith.constant 320 : index
    %c0_8 = arith.constant 0 : index
    %7 = vector.load %arg1[%c320, %c0_8] : memref<448x256xf32, #tpu.memory_space<vmem>>, vector<64x64xf32>
    %c384 = arith.constant 384 : index
    %c0_9 = arith.constant 0 : index
    %8 = vector.load %arg1[%c384, %c0_9] : memref<448x256xf32, #tpu.memory_space<vmem>>, vector<64x128xf32>
    %cst = arith.constant dense<0.000000e+00> : vector<8x256xf32>
    %9 = tpu.matmul %0, %1, %cst {dimension_numbers = #tpu.dot_dimension_numbers<[1], [0], [0], [1], [0, 0, 1, 1], [], []>} : vector<8x32xf32>, vector<32x256xf32>, vector<8x256xf32> -> vector<8x256xf32>
    %10 = vector.broadcast %2 : vector<1x256xf32> to vector<8x256xf32>
    %11 = arith.addf %9, %10 : vector<8x256xf32>
    %12 = math.tanh %11 : vector<8x256xf32>
    %cst_10 = arith.constant dense<0.000000e+00> : vector<8x64xf32>
    %13 = tpu.matmul %12, %6, %cst_10 {dimension_numbers = #tpu.dot_dimension_numbers<[1], [0], [0], [1], [0, 0, 1, 1], [], []>} : vector<8x256xf32>, vector<256x64xf32>, vector<8x64xf32> -> vector<8x64xf32>
    %14 = vector.broadcast %3 : vector<1x64xf32> to vector<8x64xf32>
    %15 = arith.addf %13, %14 : vector<8x64xf32>
    %cst_11 = arith.constant 0.000000e+00 : f32
    %16 = vector.broadcast %cst_11 : f32 to vector<8x64xf32>
    %17 = arith.maximumf %15, %16 : vector<8x64xf32>
    %cst_12 = arith.constant dense<0.000000e+00> : vector<8x64xf32>
    %18 = tpu.matmul %17, %7, %cst_12 {dimension_numbers = #tpu.dot_dimension_numbers<[1], [0], [0], [1], [0, 0, 1, 1], [], []>} : vector<8x64xf32>, vector<64x64xf32>, vector<8x64xf32> -> vector<8x64xf32>
    %19 = vector.broadcast %4 : vector<1x64xf32> to vector<8x64xf32>
    %20 = arith.addf %18, %19 : vector<8x64xf32>
    %cst_13 = arith.constant 0.000000e+00 : f32
    %21 = vector.broadcast %cst_13 : f32 to vector<8x64xf32>
    %22 = arith.maximumf %20, %21 : vector<8x64xf32>
    %cst_14 = arith.constant dense<0.000000e+00> : vector<8x128xf32>
    %23 = tpu.matmul %22, %8, %cst_14 {dimension_numbers = #tpu.dot_dimension_numbers<[1], [0], [0], [1], [0, 0, 1, 1], [], []>} : vector<8x64xf32>, vector<64x128xf32>, vector<8x128xf32> -> vector<8x128xf32>
    %24 = vector.broadcast %5 : vector<1x128xf32> to vector<8x128xf32>
    %25 = arith.addf %23, %24 : vector<8x128xf32>
    %c0_15 = arith.constant 0 : index
    %c0_16 = arith.constant 0 : index
    %26 = vector.load %arg2[%c0_15, %c0_16] : memref<8x128xf32, #tpu.memory_space<vmem>>, vector<8x128xf32>
    tpu.vector_store %arg2[%c0_15, %c0_16], %25 {strides = array<i32>} : memref<8x128xf32, #tpu.memory_space<vmem>>, vector<8x128xf32>,
    return
  }
}

</mosaic_0001>

<llo_original>
// kernel: contras_photo_regression_head.1
$region0: #{contras_photo_regression_head.1}
  #allocation0 [shape = 'u32[]', space=smem, size = 0x4, offset = 0x4, fixed_abs, tag = 'smem constant byte address 0x4 - core index']
  #allocation1 [shape = 'u32[72,128]{1,0:T(1,128)}', space=vmem, size = 0x9000, scoped, tag = 'internal scratch']
  %s0 = inlined_call_operand.vmem [shape: f32[8,32], index: 0, kind: input, shape index: {}]
  %s1 = inlined_call_operand.hbm [shape: f32[448,256], index: 1, kind: input, shape index: {}]
  %s2 = inlined_call_operand.vmem [shape: f32[8,128], index: 2, kind: output, shape index: {}]
  %s3 = sld [smem:[#allocation0]]
  $region22: #{contras_photo_regression_head.1} parent=0
    _
  %s5 = ssub.s32 1, %s3
  %s6 = scalar_select 0, %s5, %s3
  $region1: #{contras_photo_regression_head.1} parent=0
    #allocation2 [shape = 'u8[458752]{0}', space=vmem, size = 0x70000, scoped, tag = 'input window, operand 1, single buffered']
    #allocation3 [shape = 's32[1]{0}', space=sflag, size = 0x4, scoped, tag = 'scoped memory for contras_photo_regression_head.1']
    %7 = vsyncpa [#allocation3], 0
    // Predicated region
    $region2: #{contras_photo_regression_head.1} parent=1 // pred_check
      _
    $region3: #{contras_photo_regression_head.1} parent=1 // pred_check_branch
      %9 = sbr.rel (0) target = $region5
    $region4: #{contras_photo_regression_head.1} parent=1 // pred_region
      _
    $region5: #{contras_photo_regression_head.1} parent=1 // pred_fallthru
      _
    // Predicated region
    $region6: #{contras_photo_regression_head.1} parent=1 // pred_check
      _
    $region7: #{contras_photo_regression_head.1} parent=1 // pred_check_branch
      %11 = sbr.rel (0) target = $region9
    $region8: #{contras_photo_regression_head.1} parent=1 // pred_region
      %13 = vsyncadd [#allocation3], 0
      %s14 = sshll.u32 %s1, 4
      %s15 = int_to_ptr.hbm [resolvable:$true] %s14
      %s16 = sshll.u32 [#allocation2], 4
      %s17 = int_to_ptr.vmem [resolvable:$true] %s16
      %22 = dma.hbm_to_vmem [thread:$0]  %s15, 14336, %s17, [#allocation3], 256, 256, 16
    $region9: #{contras_photo_regression_head.1} parent=1 // pred_fallthru
      _
    // Predicated region
    $region10: #{contras_photo_regression_head.1} parent=1 // pred_check
      _
    $region11: #{contras_photo_regression_head.1} parent=1 // pred_check_branch
      %24 = sbr.rel (0) target = $region13
    $region12: #{contras_photo_regression_head.1} parent=1 // pred_region
      %26 = dma.done [#allocation3], 14336
    $region13: #{contras_photo_regression_head.1} parent=1 // pred_fallthru
      _
    %v27 = vld [vmem:[%s0] sm:$0xff]
    %v28 = vld [vmem:[#allocation2] sm:$0xff]
    %v29 = vld [vmem:[#allocation2 + $0x8] sm:$0xff]
    %v30 = vld [vmem:[#allocation2 + $0x10] sm:$0xff]
    %v31 = vld [vmem:[#allocation2 + $0x18] sm:$0xff]
    %v32 = vld [vmem:[#allocation2 + $0x20] sm:$0xff]
    %v33 = vld [vmem:[#allocation2 + $0x28] sm:$0xff]
    %v34 = vld [vmem:[#allocation2 + $0x30] sm:$0xff]
    %v35 = vld [vmem:[#allocation2 + $0x38] sm:$0xff]
    %s36 = scalar_lea.vmem [#allocation2], 64
    %v37 = vld [vmem:[%s36] ss:$8 sm:$0x3]
    %v38 = vld [vmem:[#allocation2 + $0x50] ss:$0 sm:$0xff]
    %v39 = vld [vmem:[#allocation2 + $0x60] ss:$0 sm:$0xff]
    %v40 = vld [vmem:[#allocation2 + $0x70] ss:$0 sm:$0xff]
    %v41 = vld [vmem:[#allocation2 + $0x80] sm:$0xff]
    %v42 = vld [vmem:[#allocation2 + $0x90] sm:$0xff]
    %v43 = vld [vmem:[#allocation2 + $0xa0] sm:$0xff]
    %v44 = vld [vmem:[#allocation2 + $0xb0] sm:$0xff]
    %v45 = vld [vmem:[#allocation2 + $0xc0] sm:$0xff]
    %v46 = vld [vmem:[#allocation2 + $0xd0] sm:$0xff]
    %v47 = vld [vmem:[#allocation2 + $0xe0] sm:$0xff]
    %v48 = vld [vmem:[#allocation2 + $0xf0] sm:$0xff]
    %v49 = vld [vmem:[#allocation2 + $0x100] sm:$0xff]
    %v50 = vld [vmem:[#allocation2 + $0x110] sm:$0xff]
    %v51 = vld [vmem:[#allocation2 + $0x120] sm:$0xff]
    %v52 = vld [vmem:[#allocation2 + $0x130] sm:$0xff]
    %v53 = vld [vmem:[#allocation2 + $0x140] sm:$0xff]
    %v54 = vld [vmem:[#allocation2 + $0x150] sm:$0xff]
    %v55 = vld [vmem:[#allocation2 + $0x160] sm:$0xff]
    %v56 = vld [vmem:[#allocation2 + $0x170] sm:$0xff]
    %v57 = vld [vmem:[#allocation2 + $0x180] sm:$0xff]
    %v58 = vld [vmem:[#allocation2 + $0x190] sm:$0xff]
    %v59 = vld [vmem:[#allocation2 + $0x1a0] sm:$0xff]
    %v60 = vld [vmem:[#allocation2 + $0x1b0] sm:$0xff]
    %v61 = vld [vmem:[#allocation2 + $0x1c0] sm:$0xff]
    %v62 = vld [vmem:[#allocation2 + $0x1d0] sm:$0xff]
    %v63 = vld [vmem:[#allocation2 + $0x1e0] sm:$0xff]
    %v64 = vld [vmem:[#allocation2 + $0x1f0] sm:$0xff]
    %v65 = vld [vmem:[#allocation2 + $0x200] sm:$0xff]
    %v66 = vld [vmem:[#allocation2 + $0x210] sm:$0xff]
    %v67 = vld [vmem:[#allocation2 + $0x220] sm:$0xff]
    %v68 = vld [vmem:[#allocation2 + $0x230] sm:$0xff]
    %v69 = vld [vmem:[#allocation2 + $0x240] sm:$0xff]
    %v70 = vld [vmem:[#allocation2 + $0x250] sm:$0xff]
    %v71 = vld [vmem:[#allocation2 + $0x260] sm:$0xff]
    %v72 = vld [vmem:[#allocation2 + $0x270] sm:$0xff]
    %v73 = vld [vmem:[#allocation2 + $0x280] sm:$0xff]
    %v74 = vld [vmem:[#allocation2 + $0x290] sm:$0xff]
    %v75 = vld [vmem:[#allocation2 + $0x2a0] sm:$0xff]
    %v76 = vld [vmem:[#allocation2 + $0x2b0] sm:$0xff]
    %v77 = vld [vmem:[#allocation2 + $0x2c0] sm:$0xff]
    %v78 = vld [vmem:[#allocation2 + $0x2d0] sm:$0xff]
    %v79 = vld [vmem:[#allocation2 + $0x2e0] sm:$0xff]
    %v80 = vld [vmem:[#allocation2 + $0x2f0] sm:$0xff]
    %v81 = vld [vmem:[#allocation2 + $0x300] sm:$0xff]
    %v82 = vld [vmem:[#allocation2 + $0x310] sm:$0xff]
    %v83 = vld [vmem:[#allocation2 + $0x320] sm:$0xff]
    %v84 = vld [vmem:[#allocation2 + $0x330] sm:$0xff]
    %v85 = vld [vmem:[#allocation2 + $0x340] sm:$0xff]
    %v86 = vld [vmem:[#allocation2 + $0x350] sm:$0xff]
    %v87 = vld [vmem:[#allocation2 + $0x360] sm:$0xff]
    %v88 = vld [vmem:[#allocation2 + $0x370] sm:$0xff]
    %v90 = vperm.slane %v37, 0
    %v91 = vperm.slane %v37, 1
    %vm94 = vcmask 261120
    %v96 = vsel %vm94, %v27, 0
    %98 = vmatpush.msra.mxu0 0.0
    %99 = vmatpush.msra.mxu0 0.0
    %100 = vmatpush.msra.mxu0 0.0
    %101 = vmatpush.msra.mxu0 0.0
    %102 = vmatpush.msra.mxu0 0.0
    %103 = vmatpush.msra.mxu0 0.0
    %104 = vmatpush.msra.mxu0 0.0
    %105 = vmatpush.msra.mxu0 0.0
    %106 = vmatpush.msra.mxu0 0.0
    %107 = vmatpush.msra.mxu0 0.0
    %108 = vmatpush.msra.mxu0 0.0
    %109 = vmatpush.msra.mxu0 0.0
    %110 = vmatpush.msra.mxu0 %v34
    %111 = vmatpush.msra.mxu0 %v32
    %112 = vmatpush.msra.mxu0 %v30
    %113 = vmatpush.msra.mxu0 %v28
    %114 = vmatmul.f32.gmra.mxu0 %v96
    %v115 = vpop.f32.mrf.mxu0
    %v116 = vadd.f32 %v90, %v115
    %117 = vdwg.mxu0
    %118 = vmatpush.msra.mxu0 0.0
    %119 = vmatpush.msra.mxu0 0.0
    %120 = vmatpush.msra.mxu0 0.0
    %121 = vmatpush.msra.mxu0 0.0
    %122 = vmatpush.msra.mxu0 0.0
    %123 = vmatpush.msra.mxu0 0.0
    %124 = vmatpush.msra.mxu0 0.0
    %125 = vmatpush.msra.mxu0 0.0
    %126 = vmatpush.msra.mxu0 0.0
    %127 = vmatpush.msra.mxu0 0.0
    %128 = vmatpush.msra.mxu0 0.0
    %129 = vmatpush.msra.mxu0 0.0
    %130 = vmatpush.msra.mxu0 %v35
    %131 = vmatpush.msra.mxu0 %v33
    %132 = vmatpush.msra.mxu0 %v31
    %133 = vmatpush.msra.mxu0 %v29
    %134 = vmatmul.f32.gmra.mxu0 %v96
    %v135 = vpop.f32.mrf.mxu0
    %v136 = vadd.f32 %v91, %v135
    %137 = vdwg.mxu0
    %v138 = vtanh.pop %v116
    %v139 = vtanh.pop %v136
    %140 = vmatpush.msra.mxu0 %v56
    %141 = vmatpush.msra.mxu0 %v55
    %142 = vmatpush.msra.mxu0 %v54
    %143 = vmatpush.msra.mxu0 %v53
    %144 = vmatpush.msra.mxu0 %v52
    %145 = vmatpush.msra.mxu0 %v51
    %146 = vmatpush.msra.mxu0 %v50
    %147 = vmatpush.msra.mxu0 %v49
    %148 = vmatpush.msra.mxu0 %v48
    %149 = vmatpush.msra.mxu0 %v47
    %150 = vmatpush.msra.mxu0 %v46
    %151 = vmatpush.msra.mxu0 %v45
    %152 = vmatpush.msra.mxu0 %v44
    %153 = vmatpush.msra.mxu0 %v43
    %154 = vmatpush.msra.mxu0 %v42
    %155 = vmatpush.msra.mxu0 %v41
    %156 = vmatmul.f32.gmra.mxu0 %v138
    %v157 = vpop.f32.mrf.mxu0
    %v158 = vadd.f32 %v38, %v157
    %159 = vdwg.mxu0
    %160 = vmatpush.msra.mxu0 %v72
    %161 = vmatpush.msra.mxu0 %v71
    %162 = vmatpush.msra.mxu0 %v70
    %163 = vmatpush.msra.mxu0 %v69
    %164 = vmatpush.msra.mxu0 %v68
    %165 = vmatpush.msra.mxu0 %v67
    %166 = vmatpush.msra.mxu0 %v66
    %167 = vmatpush.msra.mxu0 %v65
    %168 = vmatpush.msra.mxu0 %v64
    %169 = vmatpush.msra.mxu0 %v63
    %170 = vmatpush.msra.mxu0 %v62
    %171 = vmatpush.msra.mxu0 %v61
    %172 = vmatpush.msra.mxu0 %v60
    %173 = vmatpush.msra.mxu0 %v59
    %174 = vmatpush.msra.mxu0 %v58
    %175 = vmatpush.msra.mxu0 %v57
    %176 = vmatmul.f32.gmra.mxu0 %v139
    %v177 = vpop.f32.mrf.mxu0
    %v178 = vadd.f32 %v158, %v177
    %179 = vdwg.mxu0
    %v180 = vmax.f32 %v178, 0.0
    %vm181 = vcmask 523264
    %v183 = vsel %vm181, %v180, 0
    %185 = vmatpush.msra.mxu0 0.0
    %186 = vmatpush.msra.mxu0 0.0
    %187 = vmatpush.msra.mxu0 0.0
    %188 = vmatpush.msra.mxu0 0.0
    %189 = vmatpush.msra.mxu0 0.0
    %190 = vmatpush.msra.mxu0 0.0
    %191 = vmatpush.msra.mxu0 0.0
    %192 = vmatpush.msra.mxu0 0.0
    %193 = vmatpush.msra.mxu0 %v80
    %194 = vmatpush.msra.mxu0 %v79
    %195 = vmatpush.msra.mxu0 %v78
    %196 = vmatpush.msra.mxu0 %v77
    %197 = vmatpush.msra.mxu0 %v76
    %198 = vmatpush.msra.mxu0 %v75
    %199 = vmatpush.msra.mxu0 %v74
    %200 = vmatpush.msra.mxu0 %v73
    %201 = vmatmul.f32.gmra.mxu0 %v183
    %v202 = vpop.f32.mrf.mxu0
    %v203 = vadd.f32 %v39, %v202
    %204 = vdwg.mxu0
    %v205 = vmax.f32 %v203, 0.0
    %v207 = vsel %vm181, %v205, 0
    %209 = vmatpush.msra.mxu0 0.0
    %210 = vmatpush.msra.mxu0 0.0
    %211 = vmatpush.msra.mxu0 0.0
    %212 = vmatpush.msra.mxu0 0.0
    %213 = vmatpush.msra.mxu0 0.0
    %214 = vmatpush.msra.mxu0 0.0
    %215 = vmatpush.msra.mxu0 0.0
    %216 = vmatpush.msra.mxu0 0.0
    %217 = vmatpush.msra.mxu0 %v88
    %218 = vmatpush.msra.mxu0 %v87
    %219 = vmatpush.msra.mxu0 %v86
    %220 = vmatpush.msra.mxu0 %v85
    %221 = vmatpush.msra.mxu0 %v84
    %222 = vmatpush.msra.mxu0 %v83
    %223 = vmatpush.msra.mxu0 %v82
    %224 = vmatpush.msra.mxu0 %v81
    %225 = vmatmul.f32.gmra.mxu0 %v207
    %v226 = vpop.f32.mrf.mxu0
    %v227 = vadd.f32 %v40, %v226
    %228 = vdwg.mxu0
    %229 = vst [vmem:[%s2] sm:$0xff] %v227
    // Predicated region
    $region14: #{contras_photo_regression_head.1} parent=1 // pred_check
      _
    $region15: #{contras_photo_regression_head.1} parent=1 // pred_check_branch
      %231 = sbr.rel (0) target = $region17
    $region16: #{contras_photo_regression_head.1} parent=1 // pred_region
      _
    $region17: #{contras_photo_regression_head.1} parent=1 // pred_fallthru
      _
    // Predicated region
    $region18: #{contras_photo_regression_head.1} parent=1 // pred_check
      _
    $region19: #{contras_photo_regression_head.1} parent=1 // pred_check_branch
      %233 = sbr.rel (0) target = $region21
    $region20: #{contras_photo_regression_head.1} parent=1 // pred_region
      _
    $region21: #{contras_photo_regression_head.1} parent=1 // pred_fallthru
      _
    %234 = vsyncpa [#allocation3], 1

</llo_original>
